<compile_context>
chip_gen: v5e
topology: v5e:2x2
jax: 0.10.0
libtpu: 0.0.40
codegen_flags: <defaults>
</compile_context>

<pallas_src>
import jax
import jax.numpy as jnp
from jax.experimental import pallas as pl
from jax.experimental.pallas import tpu as pltpu

_LANE = 128
_SUB = 8
_TM_MAX = 256                       # batch rows per grid step (cap)
_VMEM_BUDGET = 48 * 1024 * 1024     # working-set budget; fits v5e/v6e/v7x

# Lazily resolved: does this jax build accept pipeline_mode=pl.Buffered(1)?
_SINGLE_BUFFER_OK = None


def _round_up(x: int, m: int) -> int:
    return ((x + m - 1) // m) * m


def mlp_kernel(x_ref, w1_ref, b1_ref, w2_ref, b2_ref, out_ref, acc_ref):
    """grid = (batch tiles, Din tiles).  acc_ref: (TM, H_p) f32 scratch."""
    k = pl.program_id(1)

    @pl.when(k == 0)
    def _init():
        acc_ref[...] = jnp.zeros_like(acc_ref)

    # Layer 1 partial sum: acc += x[:, k*TK:(k+1)*TK] @ W1[k*TK:(k+1)*TK, :]
    acc_ref[...] += jnp.dot(x_ref[...], w1_ref[...],
                            preferred_element_type=jnp.float32)

    @pl.when(k == pl.num_programs(1) - 1)
    def _finalize():
        h = acc_ref[...] + b1_ref[...]          # f32 bias add, (1, Hp) broadcast
        o = jnp.dot(h.astype(w2_ref.dtype), w2_ref[...],
                    preferred_element_type=jnp.float32)
        o = o + b2_ref[...]                     # f32 epilogue
        out_ref[...] = o.astype(out_ref.dtype)


def prepare_params(w1, b1, w2, b2, *, compute_dtype=jnp.bfloat16,
                   vmem_budget_bytes=_VMEM_BUDGET):
    """Pad/cast parameters once (hoisted out of the per-call path).

    w1: (Din, H)  b1: (H,)   (W1 stored pre-transposed vs torch's (H, Din))
    w2: (H, O)    b2: (O,)
    """
    Din, H = w1.shape
    H2, O = w2.shape
    assert H == H2 and b1.shape == (H,) and b2.shape == (O,)

    H_p = _round_up(H, _LANE)
    O_p = _round_up(O, _LANE)
    Din_128 = _round_up(Din, _LANE)
    wbytes = jnp.dtype(compute_dtype).itemsize

    # Size the Din (contraction) tile so resident W2 + double-buffered W1/x
    # tiles + f32 accumulator + out tiles stay under the VMEM budget.
    fixed = (H_p * O_p * wbytes            # W2 (single-buffered, resident)
             + _TM_MAX * H_p * 4           # f32 accumulator
             + 2 * _TM_MAX * O_p * 4       # out tiles (double buffered)
             + (H_p + O_p) * 4)            # biases
    per_tk = 2 * (H_p * wbytes + _TM_MAX * wbytes)   # W1 + x tile, per K column
    tk_budget = max(vmem_budget_bytes - fixed, 0) // max(per_tk, 1)
    TK = max(_LANE, (tk_budget // _LANE) * _LANE)
    TK = min(TK, 2048, Din_128)
    Din_p = _round_up(Din_128, TK)
    # TODO(synk): if `fixed` alone exceeds the budget (huge H*O), also tile H
    # for the second matmul instead of keeping W2 fully resident.

    w1p = w1 if (Din_p == Din and H_p == H) else jnp.pad(
        w1, ((0, Din_p - Din), (0, H_p - H)))
    w2p = w2 if (H_p == H and O_p == O) else jnp.pad(
        w2, ((0, H_p - H), (0, O_p - O)))
    b1p = (b1 if H_p == H else jnp.pad(b1, (0, H_p - H)))
    b2p = (b2 if O_p == O else jnp.pad(b2, (0, O_p - O)))

    return {
        "w1": w1p.astype(compute_dtype),
        "b1": b1p.astype(jnp.float32).reshape(1, H_p),
        "w2": w2p.astype(compute_dtype),
        "b2": b2p.astype(jnp.float32).reshape(1, O_p),
        "dims": (Din, H, O),
        "padded_dims": (Din_p, H_p, O_p),
        "tk": TK,
        "compute_dtype": compute_dtype,
    }


def nn_perceptron_forward(x, params):
    """Forward pass of NN_Perecptron:  (x @ W1 + b1) @ W2 + b2."""
    Din, H, O = params["dims"]
    Din_p, H_p, O_p = params["padded_dims"]
    TK = params["tk"]
    cdt = params["compute_dtype"]
    w1p, b1p, w2p, b2p = params["w1"], params["b1"], params["w2"], params["b2"]

    B = x.shape[0]
    assert x.shape == (B, Din)

    # Batch tile: up to 256 rows per step (fewer, bigger steps for the
    # memory-bound regime); small batches round up to a sublane multiple.
    TM = _TM_MAX if B >= _TM_MAX else _round_up(B, _SUB)
    B_p = _round_up(B, TM)
    # TODO(synk): on v7x (2 TCs) split a single-step batch grid into >=2 tiles
    # (or use pltpu.CORE_PARALLEL) so both TensorCores get work when
    # compute-bound.

    xp = x.astype(cdt)
    if (B_p, Din_p) != (B, Din):
        xp = jnp.pad(xp, ((0, B_p - B), (0, Din_p - Din)))

    nk = Din_p // TK
    grid = (B_p // TM, nk)

    out_dtype = x.dtype
    wbytes = jnp.dtype(cdt).itemsize
    obytes = jnp.dtype(out_dtype).itemsize

    # Scoped-VMEM sizing from the actual working set (defaults: 16 MiB v5e,
    # 32 MiB v6e/v7x).  Capped at 64 MiB so it is valid on v7x as well.
    w1_bufs = 2 if nk > 1 else 1
    working_set = (w1_bufs * TK * H_p * wbytes
                   + H_p * O_p * wbytes
                   + 2 * TM * TK * wbytes
                   + 2 * TM * O_p * obytes
                   + TM * H_p * 4
                   + 2 * (H_p + O_p) * 4)
    vmem_limit = min(64 * 1024 * 1024,
                     max(32 * 1024 * 1024, int(working_set) + 4 * 1024 * 1024))

    cost = pl.CostEstimate(
        flops=2 * B_p * (Din_p * H_p + H_p * O_p),
        transcendentals=0,
        bytes_accessed=int(xp.size * wbytes + w1p.size * wbytes
                           + w2p.size * wbytes + b1p.size * 4 + b2p.size * 4
                           + B_p * O_p * obytes),
    )

    def build(single_buffer_resident):
        # Constant-index-map blocks don't benefit from double buffering.
        resident = pl.Buffered(1) if single_buffer_resident else None
        w1_mode = resident if nk == 1 else None   # W1 streams over K if nk > 1
        grid_spec = pltpu.PrefetchScalarGridSpec(
            num_scalar_prefetch=0,
            grid=grid,
            in_specs=[
                pl.BlockSpec((TM, TK), lambda i, k: (i, k)),          # x
                pl.BlockSpec((TK, H_p), lambda i, k: (k, 0),
                             pipeline_mode=w1_mode),                  # W1
                pl.BlockSpec((1, H_p), lambda i, k: (0, 0),
                             pipeline_mode=resident),                 # b1
                pl.BlockSpec((H_p, O_p), lambda i, k: (0, 0),
                             pipeline_mode=resident),                 # W2
                pl.BlockSpec((1, O_p), lambda i, k: (0, 0),
                             pipeline_mode=resident),                 # b2
            ],
            out_specs=pl.BlockSpec((TM, O_p), lambda i, k: (i, 0)),
            scratch_shapes=[pltpu.VMEM((TM, H_p), jnp.float32)],
        )
        return pl.pallas_call(
            mlp_kernel,
            out_shape=jax.ShapeDtypeStruct((B_p, O_p), out_dtype),
            grid_spec=grid_spec,
            compiler_params=pltpu.CompilerParams(
                dimension_semantics=("parallel", "arbitrary"),
                vmem_limit_bytes=vmem_limit,
            ),
            cost_estimate=cost,
        )

    global _SINGLE_BUFFER_OK
    if _SINGLE_BUFFER_OK is None:
        try:
            out_p = jax.block_until_ready(build(True)(xp, w1p, b1p, w2p, b2p))
            _SINGLE_BUFFER_OK = True
        except Exception:
            # pipeline_mode=pl.Buffered(1) unsupported on this jax build:
            # fall back to default double buffering (correctness unchanged).
            _SINGLE_BUFFER_OK = False
            out_p = build(False)(xp, w1p, b1p, w2p, b2p)
    else:
        out_p = build(_SINGLE_BUFFER_OK)(xp, w1p, b1p, w2p, b2p)

    # Zero-padded Din/H columns contribute exact zeros to both dots; padded
    # batch rows / O columns are sliced off here.
    return out_p[:B, :O]


if __name__ == "__main__":
    # Small shapes consistent with the module: Linear(Din->H) then Linear(H->O).
    batch = 8
    input_features = 32
    hidden_features = 64
    output_features = 16

    key = jax.random.PRNGKey(0)
    kx, kw1, kb1, kw2, kb2 = jax.random.split(key, 5)

    x = jax.random.normal(kx, (batch, input_features), dtype=jnp.float32)

    # Init mimicking PyTorch's default uniform(-1/sqrt(fan_in), 1/sqrt(fan_in)).
    lim1 = 1.0 / (input_features ** 0.5)
    lim2 = 1.0 / (hidden_features ** 0.5)
    w1 = jax.random.uniform(kw1, (input_features, hidden_features),
                            minval=-lim1, maxval=lim1, dtype=jnp.float32)
    b1 = jax.random.uniform(kb1, (hidden_features,),
                            minval=-lim1, maxval=lim1, dtype=jnp.float32)
    w2 = jax.random.uniform(kw2, (hidden_features, output_features),
                            minval=-lim2, maxval=lim2, dtype=jnp.float32)
    b2 = jax.random.uniform(kb2, (output_features,),
                            minval=-lim2, maxval=lim2, dtype=jnp.float32)

    ref = (x @ w1 + b1) @ w2 + b2

    # 1) f32 compute path: bit-tight check against the f32 reference.
    params_f32 = prepare_params(w1, b1, w2, b2, compute_dtype=jnp.float32)
    out_f32 = jax.block_until_ready(nn_perceptron_forward(x, params_f32))
    assert out_f32.shape == (batch, output_features)
    assert jnp.allclose(out_f32, ref, atol=1e-5, rtol=1e-5)

    # 2) Default bf16-operand path (f32 accumulation + f32 bias epilogue):
    #    looser tolerance due to bf16 quantization of x/W1/W2.
    params_bf16 = prepare_params(w1, b1, w2, b2)   # compute_dtype=bfloat16
    out_bf16 = jax.block_until_ready(nn_perceptron_forward(x, params_bf16))
    assert out_bf16.shape == (batch, output_features)
    assert jnp.allclose(out_bf16, ref, atol=5e-2, rtol=5e-2)

    print("KERNEL_OK")
</pallas_src>

<mosaic_0001>
module attributes {stable_mosaic.version = 11 : i64} {
  func.func @mlp_kernel(%arg0: i32, %arg1: i32, %arg2: memref<8x128xf32, #tpu.memory_space<vmem>>, %arg3: memref<128x128xf32, #tpu.memory_space<vmem>>, %arg4: memref<1x128xf32, #tpu.memory_space<vmem>>, %arg5: memref<128x128xf32, #tpu.memory_space<vmem>>, %arg6: memref<1x128xf32, #tpu.memory_space<vmem>>, %arg7: memref<8x128xf32, #tpu.memory_space<vmem>>, %arg8: memref<8x128xf32, #tpu.memory_space<vmem>>) attributes {dimension_semantics = [#tpu.dimension_semantics<parallel>, #tpu.dimension_semantics<arbitrary>], iteration_bounds = array<i64: 1, 1>, scalar_prefetch = 0 : i64, scratch_operands = 1 : i64, tpu.core_type = #tpu.core_type<tc>, window_params = [{transform_indices = @transform_0, window_bounds = array<i64: 8, 128>}, {pipeline_mode = #tpu.pipeline_mode<synchronous>, transform_indices = @transform_1, window_bounds = array<i64: 128, 128>}, {pipeline_mode = #tpu.pipeline_mode<synchronous>, transform_indices = @transform_2, window_bounds = array<i64: 1, 128>}, {pipeline_mode = #tpu.pipeline_mode<synchronous>, transform_indices = @transform_3, window_bounds = array<i64: 128, 128>}, {pipeline_mode = #tpu.pipeline_mode<synchronous>, transform_indices = @transform_4, window_bounds = array<i64: 1, 128>}, {transform_indices = @transform_5, window_bounds = array<i64: 8, 128>}]} {
    %c0_i32 = arith.constant 0 : i32
    %0 = arith.cmpi eq, %arg1, %c0_i32 : i32
    %1 = arith.extui %0 : i1 to i32
    %c0_i32_0 = arith.constant 0 : i32
    %2 = arith.cmpi ne, %1, %c0_i32_0 : i32
    scf.if %2 {
      %cst_10 = arith.constant 0.000000e+00 : f32
      %12 = vector.broadcast %cst_10 : f32 to vector<8x128xf32>
      %c0_11 = arith.constant 0 : index
      %c0_12 = arith.constant 0 : index
      %13 = vector.load %arg8[%c0_11, %c0_12] : memref<8x128xf32, #tpu.memory_space<vmem>>, vector<8x128xf32>
      tpu.vector_store %arg8[%c0_11, %c0_12], %12 {strides = array<i32>} : memref<8x128xf32, #tpu.memory_space<vmem>>, vector<8x128xf32>,
    } else {
    }
    %c0 = arith.constant 0 : index
    %c0_1 = arith.constant 0 : index
    %3 = vector.load %arg8[%c0, %c0_1] : memref<8x128xf32, #tpu.memory_space<vmem>>, vector<8x128xf32>
    %c0_2 = arith.constant 0 : index
    %c0_3 = arith.constant 0 : index
    %4 = vector.load %arg2[%c0_2, %c0_3] : memref<8x128xf32, #tpu.memory_space<vmem>>, vector<8x128xf32>
    %c0_4 = arith.constant 0 : index
    %c0_5 = arith.constant 0 : index
    %5 = vector.load %arg3[%c0_4, %c0_5] : memref<128x128xf32, #tpu.memory_space<vmem>>, vector<128x128xf32>
    %cst = arith.constant dense<0.000000e+00> : vector<8x128xf32>
    %6 = tpu.matmul %4, %5, %cst {dimension_numbers = #tpu.dot_dimension_numbers<[1], [0], [0], [1], [0, 0, 1, 1], [], []>} : vector<8x128xf32>, vector<128x128xf32>, vector<8x128xf32> -> vector<8x128xf32>
    %7 = arith.addf %3, %6 : vector<8x128xf32>
    %c0_6 = arith.constant 0 : index
    %c0_7 = arith.constant 0 : index
    %8 = vector.load %arg8[%c0_6, %c0_7] : memref<8x128xf32, #tpu.memory_space<vmem>>, vector<8x128xf32>
    tpu.vector_store %arg8[%c0_6, %c0_7], %7 {strides = array<i32>} : memref<8x128xf32, #tpu.memory_space<vmem>>, vector<8x128xf32>,
    %c0_i32_8 = arith.constant 0 : i32
    %9 = arith.cmpi eq, %arg1, %c0_i32_8 : i32
    %10 = arith.extui %9 : i1 to i32
    %c0_i32_9 = arith.constant 0 : i32
    %11 = arith.cmpi ne, %10, %c0_i32_9 : i32
    scf.if %11 {
      %c0_10 = arith.constant 0 : index
      %c0_11 = arith.constant 0 : index
      %12 = vector.load %arg8[%c0_10, %c0_11] : memref<8x128xf32, #tpu.memory_space<vmem>>, vector<8x128xf32>
      %c0_12 = arith.constant 0 : index
      %c0_13 = arith.constant 0 : index
      %13 = vector.load %arg4[%c0_12, %c0_13] : memref<1x128xf32, #tpu.memory_space<vmem>>, vector<1x128xf32>
      %14 = vector.broadcast %13 : vector<1x128xf32> to vector<8x128xf32>
      %15 = arith.addf %12, %14 : vector<8x128xf32>
      %c0_14 = arith.constant 0 : index
      %c0_15 = arith.constant 0 : index
      %16 = vector.load %arg5[%c0_14, %c0_15] : memref<128x128xf32, #tpu.memory_space<vmem>>, vector<128x128xf32>
      %cst_16 = arith.constant dense<0.000000e+00> : vector<8x128xf32>
      %17 = tpu.matmul %15, %16, %cst_16 {dimension_numbers = #tpu.dot_dimension_numbers<[1], [0], [0], [1], [0, 0, 1, 1], [], []>} : vector<8x128xf32>, vector<128x128xf32>, vector<8x128xf32> -> vector<8x128xf32>
      %c0_17 = arith.constant 0 : index
      %c0_18 = arith.constant 0 : index
      %18 = vector.load %arg6[%c0_17, %c0_18] : memref<1x128xf32, #tpu.memory_space<vmem>>, vector<1x128xf32>
      %19 = vector.broadcast %18 : vector<1x128xf32> to vector<8x128xf32>
      %20 = arith.addf %17, %19 : vector<8x128xf32>
      %c0_19 = arith.constant 0 : index
      %c0_20 = arith.constant 0 : index
      %21 = vector.load %arg7[%c0_19, %c0_20] : memref<8x128xf32, #tpu.memory_space<vmem>>, vector<8x128xf32>
      tpu.vector_store %arg7[%c0_19, %c0_20], %20 {strides = array<i32>} : memref<8x128xf32, #tpu.memory_space<vmem>>, vector<8x128xf32>,
    } else {
    }
    return
  }
  func.func @transform_0(%arg0: i32, %arg1: i32) -> (i32, i32) {
    %c0_i32 = arith.constant 0 : i32
    return %arg0, %arg1 : i32, i32
  }
  func.func @transform_1(%arg0: i32, %arg1: i32) -> (i32, i32) {
    %c0_i32 = arith.constant 0 : i32
    %c0_i32_0 = arith.constant 0 : i32
    return %arg1, %c0_i32 : i32, i32
  }
  func.func @transform_2(%arg0: i32, %arg1: i32) -> (i32, i32) {
    %c0_i32 = arith.constant 0 : i32
    %c0_i32_0 = arith.constant 0 : i32
    %c0_i32_1 = arith.constant 0 : i32
    return %c0_i32, %c0_i32_0 : i32, i32
  }
  func.func @transform_3(%arg0: i32, %arg1: i32) -> (i32, i32) {
    %c0_i32 = arith.constant 0 : i32
    %c0_i32_0 = arith.constant 0 : i32
    %c0_i32_1 = arith.constant 0 : i32
    return %c0_i32, %c0_i32_0 : i32, i32
  }
  func.func @transform_4(%arg0: i32, %arg1: i32) -> (i32, i32) {
    %c0_i32 = arith.constant 0 : i32
    %c0_i32_0 = arith.constant 0 : i32
    %c0_i32_1 = arith.constant 0 : i32
    return %c0_i32, %c0_i32_0 : i32, i32
  }
  func.func @transform_5(%arg0: i32, %arg1: i32) -> (i32, i32) {
    %c0_i32 = arith.constant 0 : i32
    %c0_i32_0 = arith.constant 0 : i32
    return %arg0, %c0_i32 : i32, i32
  }
}

module attributes {stable_mosaic.version = 11 : i64} {
  func.func @mlp_kernel(%arg0: i32, %arg1: i32, %arg2: memref<8x128xf32, #tpu.memory_space<vmem>>, %arg3: memref<128x128xf32, #tpu.memory_space<vmem>>, %arg4: memref<1x128xf32, #tpu.memory_space<vmem>>, %arg5: memref<128x128xf32, #tpu.memory_space<vmem>>, %arg6: memref<1x128xf32, #tpu.memory_space<vmem>>, %arg7: memref<8x128xf32, #tpu.memory_space<vmem>>, %arg8: memref<8x128xf32, #tpu.memory_space<vmem>>) attributes {dimension_semantics = [#tpu.dimension_semantics<parallel>, #tpu.dimension_semantics<arbitrary>], iteration_bounds = array<i64: 1, 1>, scalar_prefetch = 0 : i64, scratch_operands = 1 : i64, tpu.core_type = #tpu.core_type<tc>, window_params = [{transform_indices = @transform_0, window_bounds = array<i64: 8, 128>}, {transform_indices = @transform_1, window_bounds = array<i64: 128, 128>}, {pipeline_mode = #tpu.pipeline_mode<synchronous>, transform_indices = @transform_2, window_bounds = array<i64: 1, 128>}, {pipeline_mode = #tpu.pipeline_mode<synchronous>, transform_indices = @transform_3, window_bounds = array<i64: 128, 128>}, {pipeline_mode = #tpu.pipeline_mode<synchronous>, transform_indices = @transform_4, window_bounds = array<i64: 1, 128>}, {transform_indices = @transform_5, window_bounds = array<i64: 8, 128>}]} {
    %c0_i32 = arith.constant 0 : i32
    %0 = arith.cmpi eq, %arg1, %c0_i32 : i32
    %1 = arith.extui %0 : i1 to i32
    %c0_i32_0 = arith.constant 0 : i32
    %2 = arith.cmpi ne, %1, %c0_i32_0 : i32
    scf.if %2 {
      %cst_10 = arith.constant 0.000000e+00 : f32
      %12 = vector.broadcast %cst_10 : f32 to vector<8x128xf32>
      %c0_11 = arith.constant 0 : index
      %c0_12 = arith.constant 0 : index
      %13 = vector.load %arg8[%c0_11, %c0_12] : memref<8x128xf32, #tpu.memory_space<vmem>>, vector<8x128xf32>
      tpu.vector_store %arg8[%c0_11, %c0_12], %12 {strides = array<i32>} : memref<8x128xf32, #tpu.memory_space<vmem>>, vector<8x128xf32>,
    } else {
    }
    %c0 = arith.constant 0 : index
    %c0_1 = arith.constant 0 : index
    %3 = vector.load %arg8[%c0, %c0_1] : memref<8x128xf32, #tpu.memory_space<vmem>>, vector<8x128xf32>
    %c0_2 = arith.constant 0 : index
    %c0_3 = arith.constant 0 : index
    %4 = vector.load %arg2[%c0_2, %c0_3] : memref<8x128xf32, #tpu.memory_space<vmem>>, vector<8x128xf32>
    %c0_4 = arith.constant 0 : index
    %c0_5 = arith.constant 0 : index
    %5 = vector.load %arg3[%c0_4, %c0_5] : memref<128x128xf32, #tpu.memory_space<vmem>>, vector<128x128xf32>
    %cst = arith.constant dense<0.000000e+00> : vector<8x128xf32>
    %6 = tpu.matmul %4, %5, %cst {dimension_numbers = #tpu.dot_dimension_numbers<[1], [0], [0], [1], [0, 0, 1, 1], [], []>} : vector<8x128xf32>, vector<128x128xf32>, vector<8x128xf32> -> vector<8x128xf32>
    %7 = arith.addf %3, %6 : vector<8x128xf32>
    %c0_6 = arith.constant 0 : index
    %c0_7 = arith.constant 0 : index
    %8 = vector.load %arg8[%c0_6, %c0_7] : memref<8x128xf32, #tpu.memory_space<vmem>>, vector<8x128xf32>
    tpu.vector_store %arg8[%c0_6, %c0_7], %7 {strides = array<i32>} : memref<8x128xf32, #tpu.memory_space<vmem>>, vector<8x128xf32>,
    %c0_i32_8 = arith.constant 0 : i32
    %9 = arith.cmpi eq, %arg1, %c0_i32_8 : i32
    %10 = arith.extui %9 : i1 to i32
    %c0_i32_9 = arith.constant 0 : i32
    %11 = arith.cmpi ne, %10, %c0_i32_9 : i32
    scf.if %11 {
      %c0_10 = arith.constant 0 : index
      %c0_11 = arith.constant 0 : index
      %12 = vector.load %arg8[%c0_10, %c0_11] : memref<8x128xf32, #tpu.memory_space<vmem>>, vector<8x128xf32>
      %c0_12 = arith.constant 0 : index
      %c0_13 = arith.constant 0 : index
      %13 = vector.load %arg4[%c0_12, %c0_13] : memref<1x128xf32, #tpu.memory_space<vmem>>, vector<1x128xf32>
      %14 = vector.broadcast %13 : vector<1x128xf32> to vector<8x128xf32>
      %15 = arith.addf %12, %14 : vector<8x128xf32>
      %c0_14 = arith.constant 0 : index
      %c0_15 = arith.constant 0 : index
      %16 = vector.load %arg5[%c0_14, %c0_15] : memref<128x128xf32, #tpu.memory_space<vmem>>, vector<128x128xf32>
      %cst_16 = arith.constant dense<0.000000e+00> : vector<8x128xf32>
      %17 = tpu.matmul %15, %16, %cst_16 {dimension_numbers = #tpu.dot_dimension_numbers<[1], [0], [0], [1], [0, 0, 1, 1], [], []>} : vector<8x128xf32>, vector<128x128xf32>, vector<8x128xf32> -> vector<8x128xf32>
      %c0_17 = arith.constant 0 : index
      %c0_18 = arith.constant 0 : index
      %18 = vector.load %arg6[%c0_17, %c0_18] : memref<1x128xf32, #tpu.memory_space<vmem>>, vector<1x128xf32>
      %19 = vector.broadcast %18 : vector<1x128xf32> to vector<8x128xf32>
      %20 = arith.addf %17, %19 : vector<8x128xf32>
      %c0_19 = arith.constant 0 : index
      %c0_20 = arith.constant 0 : index
      %21 = vector.load %arg7[%c0_19, %c0_20] : memref<8x128xf32, #tpu.memory_space<vmem>>, vector<8x128xf32>
      tpu.vector_store %arg7[%c0_19, %c0_20], %20 {strides = array<i32>} : memref<8x128xf32, #tpu.memory_space<vmem>>, vector<8x128xf32>,
    } else {
    }
    return
  }
  func.func @transform_0(%arg0: i32, %arg1: i32) -> (i32, i32) {
    %c0_i32 = arith.constant 0 : i32
    return %arg0, %arg1 : i32, i32
  }
  func.func @transform_1(%arg0: i32, %arg1: i32) -> (i32, i32) {
    %c0_i32 = arith.constant 0 : i32
    %c0_i32_0 = arith.constant 0 : i32
    return %arg1, %c0_i32 : i32, i32
  }
  func.func @transform_2(%arg0: i32, %arg1: i32) -> (i32, i32) {
    %c0_i32 = arith.constant 0 : i32
    %c0_i32_0 = arith.constant 0 : i32
    %c0_i32_1 = arith.constant 0 : i32
    return %c0_i32, %c0_i32_0 : i32, i32
  }
  func.func @transform_3(%arg0: i32, %arg1: i32) -> (i32, i32) {
    %c0_i32 = arith.constant 0 : i32
    %c0_i32_0 = arith.constant 0 : i32
    %c0_i32_1 = arith.constant 0 : i32
    return %c0_i32, %c0_i32_0 : i32, i32
  }
  func.func @transform_4(%arg0: i32, %arg1: i32) -> (i32, i32) {
    %c0_i32 = arith.constant 0 : i32
    %c0_i32_0 = arith.constant 0 : i32
    %c0_i32_1 = arith.constant 0 : i32
    return %c0_i32, %c0_i32_0 : i32, i32
  }
  func.func @transform_5(%arg0: i32, %arg1: i32) -> (i32, i32) {
    %c0_i32 = arith.constant 0 : i32
    %c0_i32_0 = arith.constant 0 : i32
    return %arg0, %c0_i32 : i32, i32
  }
}

</mosaic_0001>

<llo_original>
// kernel: tpu_custom_call.1
$region0: #{tpu_custom_call.1}
  #allocation0 [shape = 'u32[]', space=smem, size = 0x4, offset = 0x4, fixed_abs, tag = 'smem constant byte address 0x4 - core index']
  #allocation1 [shape = 'u32[72,128]{1,0:T(1,128)}', space=vmem, size = 0x9000, scoped, tag = 'internal scratch']
  #allocation2 [shape = 'f32[8,128]{1,0:T(8,128)}', space=vmem, size = 0x1000, scoped, tag = 'scratch operand']
  %s0 = inlined_call_operand.hbm [shape: f32[8,128], index: 0, kind: input, shape index: {}]
  %s1 = inlined_call_operand.hbm [shape: f32[128,128], index: 1, kind: input, shape index: {}]
  %s2 = inlined_call_operand.vmem [shape: f32[1,128], index: 2, kind: input, shape index: {}]
  %s3 = inlined_call_operand.hbm [shape: f32[128,128], index: 3, kind: input, shape index: {}]
  %s4 = inlined_call_operand.vmem [shape: f32[1,128], index: 4, kind: input, shape index: {}]
  %s5 = inlined_call_operand.hbm [shape: f32[8,128], index: 5, kind: output, shape index: {}]
  %s6 = sld [smem:[#allocation0]]
  $region50: #{tpu_custom_call.1} parent=0
    _
  %s8 = ssub.s32 1, %s6
  %s9 = scalar_select 0, %s8, %s6
  $region1: #{tpu_custom_call.1} parent=0
    #allocation3 [shape = 'u8[4096]{0}', space=vmem, size = 0x1000, scoped, tag = 'input window, operand 0, single buffered']
    #allocation4 [shape = 's32[1]{0}', space=sflag, size = 0x4, scoped, tag = 'scoped memory for tpu_custom_call.1']
    #allocation5 [shape = 's32[1]{0}', space=sflag, size = 0x4, scoped, tag = 'scoped memory for tpu_custom_call.1']
    #allocation6 [shape = 'u8[65536]{0}', space=vmem, size = 0x10000, scoped, tag = 'input window, operand 1, single buffered']
    #allocation7 [shape = 's32[1]{0}', space=sflag, size = 0x4, scoped, tag = 'scoped memory for tpu_custom_call.1']
    #allocation8 [shape = 'u8[65536]{0}', space=vmem, size = 0x10000, scoped, tag = 'input window, operand 3, single buffered']
    #allocation9 [shape = 'u8[4096]{0}', space=vmem, size = 0x1000, scoped, tag = 'output window, operand 0, single buffered']
    %10 = vsyncpa [#allocation4], 0
    %11 = vsyncpa [#allocation7], 0
    %12 = vsyncpa [#allocation5], 0
    // Predicated region
    $region2: #{tpu_custom_call.1} parent=1 // pred_check
      _
    $region3: #{tpu_custom_call.1} parent=1 // pred_check_branch
      %14 = sbr.rel (0) target = $region5
    $region4: #{tpu_custom_call.1} parent=1 // pred_region
      %16 = vsyncadd [#allocation4], 0
      %s18 = sshll.u32 %s0, 4
      %s19 = int_to_ptr.hbm [resolvable:$true] %s18
      %s20 = sshll.u32 [#allocation3], 4
      %s21 = int_to_ptr.vmem [resolvable:$true] %s20
      %23 = dma.hbm_to_vmem [thread:$0]  %s19, 128, %s21, [#allocation4]
    $region5: #{tpu_custom_call.1} parent=1 // pred_fallthru
      _
    // Predicated region
    $region6: #{tpu_custom_call.1} parent=1 // pred_check
      _
    $region7: #{tpu_custom_call.1} parent=1 // pred_check_branch
      %25 = sbr.rel (0) target = $region9
    $region8: #{tpu_custom_call.1} parent=1 // pred_region
      %27 = vsyncadd [#allocation7], 0
      %s28 = sshll.u32 %s1, 4
      %s29 = int_to_ptr.hbm [resolvable:$true] %s28
      %s30 = sshll.u32 [#allocation6], 4
      %s31 = int_to_ptr.vmem [resolvable:$true] %s30
      %36 = dma.hbm_to_vmem [thread:$0]  %s29, 2048, %s31, [#allocation7], 128, 128, 8
    $region9: #{tpu_custom_call.1} parent=1 // pred_fallthru
      _
    // Predicated region
    $region10: #{tpu_custom_call.1} parent=1 // pred_check
      _
    $region11: #{tpu_custom_call.1} parent=1 // pred_check_branch
      %38 = sbr.rel (0) target = $region13
    $region12: #{tpu_custom_call.1} parent=1 // pred_region
      _
    $region13: #{tpu_custom_call.1} parent=1 // pred_fallthru
      _
    // Predicated region
    $region14: #{tpu_custom_call.1} parent=1 // pred_check
      _
    $region15: #{tpu_custom_call.1} parent=1 // pred_check_branch
      %40 = sbr.rel (0) target = $region17
    $region16: #{tpu_custom_call.1} parent=1 // pred_region
      %42 = vsyncadd [#allocation7], 0
      %s43 = sshll.u32 %s3, 4
      %s44 = int_to_ptr.hbm [resolvable:$true] %s43
      %s45 = sshll.u32 [#allocation8], 4
      %s46 = int_to_ptr.vmem [resolvable:$true] %s45
      %51 = dma.hbm_to_vmem [thread:$0]  %s44, 2048, %s46, [#allocation7], 128, 128, 8
    $region17: #{tpu_custom_call.1} parent=1 // pred_fallthru
      _
    // Predicated region
    $region18: #{tpu_custom_call.1} parent=1 // pred_check
      _
    $region19: #{tpu_custom_call.1} parent=1 // pred_check_branch
      %53 = sbr.rel (0) target = $region21
    $region20: #{tpu_custom_call.1} parent=1 // pred_region
      _
    $region21: #{tpu_custom_call.1} parent=1 // pred_fallthru
      _
    // Predicated region
    $region22: #{tpu_custom_call.1} parent=1 // pred_check
      _
    $region23: #{tpu_custom_call.1} parent=1 // pred_check_branch
      %55 = sbr.rel (0) target = $region25
    $region24: #{tpu_custom_call.1} parent=1 // pred_region
      %57 = dma.done [#allocation4], 128
    $region25: #{tpu_custom_call.1} parent=1 // pred_fallthru
      _
    // Predicated region
    $region26: #{tpu_custom_call.1} parent=1 // pred_check
      _
    $region27: #{tpu_custom_call.1} parent=1 // pred_check_branch
      %59 = sbr.rel (0) target = $region29
    $region28: #{tpu_custom_call.1} parent=1 // pred_region
      %61 = dma.done [#allocation7], 2048
    $region29: #{tpu_custom_call.1} parent=1 // pred_fallthru
      _
    // Predicated region
    $region30: #{tpu_custom_call.1} parent=1 // pred_check
      _
    $region31: #{tpu_custom_call.1} parent=1 // pred_check_branch
      %63 = sbr.rel (0) target = $region33
    $region32: #{tpu_custom_call.1} parent=1 // pred_region
      %65 = dma.done [#allocation7], 2048
    $region33: #{tpu_custom_call.1} parent=1 // pred_fallthru
      _
    %p66 = scmp.eq.s32.totalorder 0, 0
    // Predicated region
    $region34: #{tpu_custom_call.1} parent=1 // pred_check
      %p67 = pneg %p66
    $region35: #{tpu_custom_call.1} parent=1 // pred_check_branch
      %69 = sbr.rel (%p67) target = $region37
    $region36: #{tpu_custom_call.1} parent=1 // pred_region
      %70 = vst [vmem:[#allocation2] sm:$0xff] 0.0
    $region37: #{tpu_custom_call.1} parent=1 // pred_fallthru
      _
    %v71 = vld [vmem:[#allocation2] sm:$0xff]
    %v72 = vld [vmem:[#allocation3] sm:$0xff]
    %v73 = vld [vmem:[#allocation6] sm:$0xff]
    %v74 = vld [vmem:[#allocation6 + $0x8] sm:$0xff]
    %v75 = vld [vmem:[#allocation6 + $0x10] sm:$0xff]
    %v76 = vld [vmem:[#allocation6 + $0x18] sm:$0xff]
    %v77 = vld [vmem:[#allocation6 + $0x20] sm:$0xff]
    %v78 = vld [vmem:[#allocation6 + $0x28] sm:$0xff]
    %v79 = vld [vmem:[#allocation6 + $0x30] sm:$0xff]
    %v80 = vld [vmem:[#allocation6 + $0x38] sm:$0xff]
    %v81 = vld [vmem:[#allocation6 + $0x40] sm:$0xff]
    %v82 = vld [vmem:[#allocation6 + $0x48] sm:$0xff]
    %v83 = vld [vmem:[#allocation6 + $0x50] sm:$0xff]
    %v84 = vld [vmem:[#allocation6 + $0x58] sm:$0xff]
    %v85 = vld [vmem:[#allocation6 + $0x60] sm:$0xff]
    %v86 = vld [vmem:[#allocation6 + $0x68] sm:$0xff]
    %v87 = vld [vmem:[#allocation6 + $0x70] sm:$0xff]
    %v88 = vld [vmem:[#allocation6 + $0x78] sm:$0xff]
    %89 = vmatpush.msra.mxu0 %v88
    %90 = vmatpush.msra.mxu0 %v87
    %91 = vmatpush.msra.mxu0 %v86
    %92 = vmatpush.msra.mxu0 %v85
    %93 = vmatpush.msra.mxu0 %v84
    %94 = vmatpush.msra.mxu0 %v83
    %95 = vmatpush.msra.mxu0 %v82
    %96 = vmatpush.msra.mxu0 %v81
    %97 = vmatpush.msra.mxu0 %v80
    %98 = vmatpush.msra.mxu0 %v79
    %99 = vmatpush.msra.mxu0 %v78
    %100 = vmatpush.msra.mxu0 %v77
    %101 = vmatpush.msra.mxu0 %v76
    %102 = vmatpush.msra.mxu0 %v75
    %103 = vmatpush.msra.mxu0 %v74
    %104 = vmatpush.msra.mxu0 %v73
    %105 = vmatmul.f32.gmra.mxu0 %v72
    %v106 = vpop.f32.mrf.mxu0
    %v107 = vadd.f32 0.0, %v106
    %108 = vdwg.mxu0
    %v109 = vadd.f32 %v71, %v107
    %110 = vst [vmem:[#allocation2] sm:$0xff] %v109
    // Predicated region
    $region38: #{tpu_custom_call.1} parent=1 // pred_check
      %p111 = pneg %p66
    $region39: #{tpu_custom_call.1} parent=1 // pred_check_branch
      %113 = sbr.rel (%p111) target = $region41
    $region40: #{tpu_custom_call.1} parent=1 // pred_region
      %v114 = vld [vmem:[#allocation2] sm:$0xff]
      %v115 = vld [vmem:[%s2] sm:$0x1]
      %v117 = vperm.slane %v115, 0
      %v119 = vadd.f32 %v114, %v117
      %v120 = vld [vmem:[#allocation8] sm:$0xff]
      %v121 = vld [vmem:[#allocation8 + $0x8] sm:$0xff]
      %v122 = vld [vmem:[#allocation8 + $0x10] sm:$0xff]
      %v123 = vld [vmem:[#allocation8 + $0x18] sm:$0xff]
      %v124 = vld [vmem:[#allocation8 + $0x20] sm:$0xff]
      %v125 = vld [vmem:[#allocation8 + $0x28] sm:$0xff]
      %v126 = vld [vmem:[#allocation8 + $0x30] sm:$0xff]
      %v127 = vld [vmem:[#allocation8 + $0x38] sm:$0xff]
      %v128 = vld [vmem:[#allocation8 + $0x40] sm:$0xff]
      %v129 = vld [vmem:[#allocation8 + $0x48] sm:$0xff]
      %v130 = vld [vmem:[#allocation8 + $0x50] sm:$0xff]
      %v131 = vld [vmem:[#allocation8 + $0x58] sm:$0xff]
      %v132 = vld [vmem:[#allocation8 + $0x60] sm:$0xff]
      %v133 = vld [vmem:[#allocation8 + $0x68] sm:$0xff]
      %v134 = vld [vmem:[#allocation8 + $0x70] sm:$0xff]
      %v135 = vld [vmem:[#allocation8 + $0x78] sm:$0xff]
      %v136 = vld [vmem:[%s4] sm:$0x1]
      %v138 = vperm.slane %v136, 0
      %140 = vmatpush.msra.mxu0 %v135
      %141 = vmatpush.msra.mxu0 %v134
      %142 = vmatpush.msra.mxu0 %v133
      %143 = vmatpush.msra.mxu0 %v132
      %144 = vmatpush.msra.mxu0 %v131
      %145 = vmatpush.msra.mxu0 %v130
      %146 = vmatpush.msra.mxu0 %v129
      %147 = vmatpush.msra.mxu0 %v128
      %148 = vmatpush.msra.mxu0 %v127
      %149 = vmatpush.msra.mxu0 %v126
      %150 = vmatpush.msra.mxu0 %v125
      %151 = vmatpush.msra.mxu0 %v124
      %152 = vmatpush.msra.mxu0 %v123
      %153 = vmatpush.msra.mxu0 %v122
      %154 = vmatpush.msra.mxu0 %v121
      %155 = vmatpush.msra.mxu0 %v120
      %156 = vmatmul.f32.gmra.mxu0 %v119
      %v157 = vpop.f32.mrf.mxu0
      %v158 = vadd.f32 %v138, %v157
      %159 = vdwg.mxu0
      %160 = vst [vmem:[#allocation9] sm:$0xff] %v158
    $region41: #{tpu_custom_call.1} parent=1 // pred_fallthru
      _
    // Predicated region
    $region42: #{tpu_custom_call.1} parent=1 // pred_check
      _
    $region43: #{tpu_custom_call.1} parent=1 // pred_check_branch
      %162 = sbr.rel (0) target = $region45
    $region44: #{tpu_custom_call.1} parent=1 // pred_region
      %164 = vsyncadd [#allocation5], 0
      %s166 = sshll.u32 [#allocation9], 4
      %s167 = int_to_ptr.vmem [resolvable:$true] %s166
      %s168 = sshll.u32 %s5, 4
      %s169 = int_to_ptr.hbm [resolvable:$true] %s168
      %171 = dma.vmem_to_hbm [thread:$0]  %s167, 128, %s169, [#allocation5]
    $region45: #{tpu_custom_call.1} parent=1 // pred_fallthru
      _
    // Predicated region
    $region46: #{tpu_custom_call.1} parent=1 // pred_check
      _
    $region47: #{tpu_custom_call.1} parent=1 // pred_check_branch
      %173 = sbr.rel (0) target = $region49
    $region48: #{tpu_custom_call.1} parent=1 // pred_region
      %175 = dma.done [#allocation5], 128
    $region49: #{tpu_custom_call.1} parent=1 // pred_fallthru
      _
    %176 = vsyncpa [#allocation4], 1
    %177 = vsyncpa [#allocation7], 1
    %178 = vsyncpa [#allocation5], 1

// kernel: tpu_custom_call.1
$region0: #{tpu_custom_call.1}
  #allocation0 [shape = 'u32[]', space=smem, size = 0x4, offset = 0x4, fixed_abs, tag = 'smem constant byte address 0x4 - core index']
  #allocation1 [shape = 'u32[72,128]{1,0:T(1,128)}', space=vmem, size = 0x9000, scoped, tag = 'internal scratch']
  #allocation2 [shape = 'f32[8,128]{1,0:T(8,128)}', space=vmem, size = 0x1000, scoped, tag = 'scratch operand']
  %s0 = inlined_call_operand.hbm [shape: f32[8,128], index: 0, kind: input, shape index: {}]
  %s1 = inlined_call_operand.hbm [shape: f32[128,128], index: 1, kind: input, shape index: {}]
  %s2 = inlined_call_operand.vmem [shape: f32[1,128], index: 2, kind: input, shape index: {}]
  %s3 = inlined_call_operand.hbm [shape: f32[128,128], index: 3, kind: input, shape index: {}]
  %s4 = inlined_call_operand.vmem [shape: f32[1,128], index: 4, kind: input, shape index: {}]
  %s5 = inlined_call_operand.hbm [shape: f32[8,128], index: 5, kind: output, shape index: {}]
  %s6 = sld [smem:[#allocation0]]
  $region50: #{tpu_custom_call.1} parent=0
    _
  %s8 = ssub.s32 1, %s6
  %s9 = scalar_select 0, %s8, %s6
  $region1: #{tpu_custom_call.1} parent=0
    #allocation3 [shape = 'u8[4096]{0}', space=vmem, size = 0x1000, scoped, tag = 'input window, operand 0, single buffered']
    #allocation4 [shape = 's32[1]{0}', space=sflag, size = 0x4, scoped, tag = 'scoped memory for tpu_custom_call.1']
    #allocation5 [shape = 's32[1]{0}', space=sflag, size = 0x4, scoped, tag = 'scoped memory for tpu_custom_call.1']
    #allocation6 [shape = 'u8[65536]{0}', space=vmem, size = 0x10000, scoped, tag = 'input window, operand 1, single buffered']
    #allocation7 [shape = 's32[1]{0}', space=sflag, size = 0x4, scoped, tag = 'scoped memory for tpu_custom_call.1']
    #allocation8 [shape = 'u8[65536]{0}', space=vmem, size = 0x10000, scoped, tag = 'input window, operand 3, single buffered']
    #allocation9 [shape = 'u8[4096]{0}', space=vmem, size = 0x1000, scoped, tag = 'output window, operand 0, single buffered']
    %10 = vsyncpa [#allocation4], 0
    %11 = vsyncpa [#allocation7], 0
    %12 = vsyncpa [#allocation5], 0
    // Predicated region
    $region2: #{tpu_custom_call.1} parent=1 // pred_check
      _
    $region3: #{tpu_custom_call.1} parent=1 // pred_check_branch
      %14 = sbr.rel (0) target = $region5
    $region4: #{tpu_custom_call.1} parent=1 // pred_region
      %16 = vsyncadd [#allocation4], 0
      %s18 = sshll.u32 %s0, 4
      %s19 = int_to_ptr.hbm [resolvable:$true] %s18
      %s20 = sshll.u32 [#allocation3], 4
      %s21 = int_to_ptr.vmem [resolvable:$true] %s20
      %23 = dma.hbm_to_vmem [thread:$0]  %s19, 128, %s21, [#allocation4]
    $region5: #{tpu_custom_call.1} parent=1 // pred_fallthru
      _
    // Predicated region
    $region6: #{tpu_custom_call.1} parent=1 // pred_check
      _
    $region7: #{tpu_custom_call.1} parent=1 // pred_check_branch
      %25 = sbr.rel (0) target = $region9
    $region8: #{tpu_custom_call.1} parent=1 // pred_region
      %27 = vsyncadd [#allocation7], 0
      %s28 = sshll.u32 %s1, 4
      %s29 = int_to_ptr.hbm [resolvable:$true] %s28
      %s30 = sshll.u32 [#allocation6], 4
      %s31 = int_to_ptr.vmem [resolvable:$true] %s30
      %36 = dma.hbm_to_vmem [thread:$0]  %s29, 2048, %s31, [#allocation7], 128, 128, 8
    $region9: #{tpu_custom_call.1} parent=1 // pred_fallthru
      _
    // Predicated region
    $region10: #{tpu_custom_call.1} parent=1 // pred_check
      _
    $region11: #{tpu_custom_call.1} parent=1 // pred_check_branch
      %38 = sbr.rel (0) target = $region13
    $region12: #{tpu_custom_call.1} parent=1 // pred_region
      _
    $region13: #{tpu_custom_call.1} parent=1 // pred_fallthru
      _
    // Predicated region
    $region14: #{tpu_custom_call.1} parent=1 // pred_check
      _
    $region15: #{tpu_custom_call.1} parent=1 // pred_check_branch
      %40 = sbr.rel (0) target = $region17
    $region16: #{tpu_custom_call.1} parent=1 // pred_region
      %42 = vsyncadd [#allocation7], 0
      %s43 = sshll.u32 %s3, 4
      %s44 = int_to_ptr.hbm [resolvable:$true] %s43
      %s45 = sshll.u32 [#allocation8], 4
      %s46 = int_to_ptr.vmem [resolvable:$true] %s45
      %51 = dma.hbm_to_vmem [thread:$0]  %s44, 2048, %s46, [#allocation7], 128, 128, 8
    $region17: #{tpu_custom_call.1} parent=1 // pred_fallthru
      _
    // Predicated region
    $region18: #{tpu_custom_call.1} parent=1 // pred_check
      _
    $region19: #{tpu_custom_call.1} parent=1 // pred_check_branch
      %53 = sbr.rel (0) target = $region21
    $region20: #{tpu_custom_call.1} parent=1 // pred_region
      _
    $region21: #{tpu_custom_call.1} parent=1 // pred_fallthru
      _
    // Predicated region
    $region22: #{tpu_custom_call.1} parent=1 // pred_check
      _
    $region23: #{tpu_custom_call.1} parent=1 // pred_check_branch
      %55 = sbr.rel (0) target = $region25
    $region24: #{tpu_custom_call.1} parent=1 // pred_region
      %57 = dma.done [#allocation4], 128
    $region25: #{tpu_custom_call.1} parent=1 // pred_fallthru
      _
    // Predicated region
    $region26: #{tpu_custom_call.1} parent=1 // pred_check
      _
    $region27: #{tpu_custom_call.1} parent=1 // pred_check_branch
      %59 = sbr.rel (0) target = $region29
    $region28: #{tpu_custom_call.1} parent=1 // pred_region
      %61 = dma.done [#allocation7], 2048
    $region29: #{tpu_custom_call.1} parent=1 // pred_fallthru
      _
    // Predicated region
    $region30: #{tpu_custom_call.1} parent=1 // pred_check
      _
    $region31: #{tpu_custom_call.1} parent=1 // pred_check_branch
      %63 = sbr.rel (0) target = $region33
    $region32: #{tpu_custom_call.1} parent=1 // pred_region
      %65 = dma.done [#allocation7], 2048
    $region33: #{tpu_custom_call.1} parent=1 // pred_fallthru
      _
    %p66 = scmp.eq.s32.totalorder 0, 0
    // Predicated region
    $region34: #{tpu_custom_call.1} parent=1 // pred_check
      %p67 = pneg %p66
    $region35: #{tpu_custom_call.1} parent=1 // pred_check_branch
      %69 = sbr.rel (%p67) target = $region37
    $region36: #{tpu_custom_call.1} parent=1 // pred_region
      %70 = vst [vmem:[#allocation2] sm:$0xff] 0.0
    $region37: #{tpu_custom_call.1} parent=1 // pred_fallthru
      _
    %v71 = vld [vmem:[#allocation2] sm:$0xff]
    %v72 = vld [vmem:[#allocation3] sm:$0xff]
    %v73 = vld [vmem:[#allocation6] sm:$0xff]
    %v74 = vld [vmem:[#allocation6 + $0x8] sm:$0xff]
    %v75 = vld [vmem:[#allocation6 + $0x10] sm:$0xff]
    %v76 = vld [vmem:[#allocation6 + $0x18] sm:$0xff]
    %v77 = vld [vmem:[#allocation6 + $0x20] sm:$0xff]
    %v78 = vld [vmem:[#allocation6 + $0x28] sm:$0xff]
    %v79 = vld [vmem:[#allocation6 + $0x30] sm:$0xff]
    %v80 = vld [vmem:[#allocation6 + $0x38] sm:$0xff]
    %v81 = vld [vmem:[#allocation6 + $0x40] sm:$0xff]
    %v82 = vld [vmem:[#allocation6 + $0x48] sm:$0xff]
    %v83 = vld [vmem:[#allocation6 + $0x50] sm:$0xff]
    %v84 = vld [vmem:[#allocation6 + $0x58] sm:$0xff]
    %v85 = vld [vmem:[#allocation6 + $0x60] sm:$0xff]
    %v86 = vld [vmem:[#allocation6 + $0x68] sm:$0xff]
    %v87 = vld [vmem:[#allocation6 + $0x70] sm:$0xff]
    %v88 = vld [vmem:[#allocation6 + $0x78] sm:$0xff]
    %89 = vmatpush.msra.mxu0 %v88
    %90 = vmatpush.msra.mxu0 %v87
    %91 = vmatpush.msra.mxu0 %v86
    %92 = vmatpush.msra.mxu0 %v85
    %93 = vmatpush.msra.mxu0 %v84
    %94 = vmatpush.msra.mxu0 %v83
    %95 = vmatpush.msra.mxu0 %v82
    %96 = vmatpush.msra.mxu0 %v81
    %97 = vmatpush.msra.mxu0 %v80
    %98 = vmatpush.msra.mxu0 %v79
    %99 = vmatpush.msra.mxu0 %v78
    %100 = vmatpush.msra.mxu0 %v77
    %101 = vmatpush.msra.mxu0 %v76
    %102 = vmatpush.msra.mxu0 %v75
    %103 = vmatpush.msra.mxu0 %v74
    %104 = vmatpush.msra.mxu0 %v73
    %105 = vmatmul.f32.gmra.mxu0 %v72
    %v106 = vpop.f32.mrf.mxu0
    %v107 = vadd.f32 0.0, %v106
    %108 = vdwg.mxu0
    %v109 = vadd.f32 %v71, %v107
    %110 = vst [vmem:[#allocation2] sm:$0xff] %v109
    // Predicated region
    $region38: #{tpu_custom_call.1} parent=1 // pred_check
      %p111 = pneg %p66
    $region39: #{tpu_custom_call.1} parent=1 // pred_check_branch
      %113 = sbr.rel (%p111) target = $region41
    $region40: #{tpu_custom_call.1} parent=1 // pred_region
      %v114 = vld [vmem:[#allocation2] sm:$0xff]
      %v115 = vld [vmem:[%s2] sm:$0x1]
      %v117 = vperm.slane %v115, 0
      %v119 = vadd.f32 %v114, %v117
      %v120 = vld [vmem:[#allocation8] sm:$0xff]
      %v121 = vld [vmem:[#allocation8 + $0x8] sm:$0xff]
      %v122 = vld [vmem:[#allocation8 + $0x10] sm:$0xff]
      %v123 = vld [vmem:[#allocation8 + $0x18] sm:$0xff]
      %v124 = vld [vmem:[#allocation8 + $0x20] sm:$0xff]
      %v125 = vld [vmem:[#allocation8 + $0x28] sm:$0xff]
      %v126 = vld [vmem:[#allocation8 + $0x30] sm:$0xff]
      %v127 = vld [vmem:[#allocation8 + $0x38] sm:$0xff]
      %v128 = vld [vmem:[#allocation8 + $0x40] sm:$0xff]
      %v129 = vld [vmem:[#allocation8 + $0x48] sm:$0xff]
      %v130 = vld [vmem:[#allocation8 + $0x50] sm:$0xff]
      %v131 = vld [vmem:[#allocation8 + $0x58] sm:$0xff]
      %v132 = vld [vmem:[#allocation8 + $0x60] sm:$0xff]
      %v133 = vld [vmem:[#allocation8 + $0x68] sm:$0xff]
      %v134 = vld [vmem:[#allocation8 + $0x70] sm:$0xff]
      %v135 = vld [vmem:[#allocation8 + $0x78] sm:$0xff]
      %v136 = vld [vmem:[%s4] sm:$0x1]
      %v138 = vperm.slane %v136, 0
      %140 = vmatpush.msra.mxu0 %v135
      %141 = vmatpush.msra.mxu0 %v134
      %142 = vmatpush.msra.mxu0 %v133
      %143 = vmatpush.msra.mxu0 %v132
      %144 = vmatpush.msra.mxu0 %v131
      %145 = vmatpush.msra.mxu0 %v130
      %146 = vmatpush.msra.mxu0 %v129
      %147 = vmatpush.msra.mxu0 %v128
      %148 = vmatpush.msra.mxu0 %v127
      %149 = vmatpush.msra.mxu0 %v126
      %150 = vmatpush.msra.mxu0 %v125
      %151 = vmatpush.msra.mxu0 %v124
      %152 = vmatpush.msra.mxu0 %v123
      %153 = vmatpush.msra.mxu0 %v122
      %154 = vmatpush.msra.mxu0 %v121
      %155 = vmatpush.msra.mxu0 %v120
      %156 = vmatmul.f32.gmra.mxu0 %v119
      %v157 = vpop.f32.mrf.mxu0
      %v158 = vadd.f32 %v138, %v157
      %159 = vdwg.mxu0
      %160 = vst [vmem:[#allocation9] sm:$0xff] %v158
    $region41: #{tpu_custom_call.1} parent=1 // pred_fallthru
      _
    // Predicated region
    $region42: #{tpu_custom_call.1} parent=1 // pred_check
      _
    $region43: #{tpu_custom_call.1} parent=1 // pred_check_branch
      %162 = sbr.rel (0) target = $region45
    $region44: #{tpu_custom_call.1} parent=1 // pred_region
      %164 = vsyncadd [#allocation5], 0
      %s166 = sshll.u32 [#allocation9], 4
      %s167 = int_to_ptr.vmem [resolvable:$true] %s166
      %s168 = sshll.u32 %s5, 4
      %s169 = int_to_ptr.hbm [resolvable:$true] %s168
      %171 = dma.vmem_to_hbm [thread:$0]  %s167, 128, %s169, [#allocation5]
    $region45: #{tpu_custom_call.1} parent=1 // pred_fallthru
      _
    // Predicated region
    $region46: #{tpu_custom_call.1} parent=1 // pred_check
      _
    $region47: #{tpu_custom_call.1} parent=1 // pred_check_branch
      %173 = sbr.rel (0) target = $region49
    $region48: #{tpu_custom_call.1} parent=1 // pred_region
      %175 = dma.done [#allocation5], 128
    $region49: #{tpu_custom_call.1} parent=1 // pred_fallthru
      _
    %176 = vsyncpa [#allocation4], 1
    %177 = vsyncpa [#allocation7], 1
    %178 = vsyncpa [#allocation5], 1

</llo_original>
